<compile_context>
chip_gen: v5e
topology: v5e:2x2
jax: 0.10.0
libtpu: 0.0.40
codegen_flags: <defaults>
</compile_context>

<pallas_src>
import functools

import jax
import jax.numpy as jnp
from jax.experimental import pallas as pl
from jax.experimental.pallas import tpu as pltpu


def _pick_tile(dim, pref):
    """Largest clean tile: full dim if small or ragged, else the preferred tile."""
    if dim <= pref:
        return dim
    if dim % pref == 0:
        return pref
    return dim  # TODO(synk): ragged dims fall back to a single whole-dim block.


# ----------------------------------------------------------------------------
# Tiled matmul kernel: out = x @ w   (bf16 operands, f32 accumulation)
# ----------------------------------------------------------------------------
def _matmul_kernel(x_ref, w_ref, o_ref, acc_ref):
    @pl.when(pl.program_id(2) == 0)
    def _():
        acc_ref[...] = jnp.zeros_like(acc_ref)

    acc_ref[...] += jnp.dot(
        x_ref[...], w_ref[...], preferred_element_type=jnp.float32
    )

    @pl.when(pl.program_id(2) == pl.num_programs(2) - 1)
    def _():
        o_ref[...] = acc_ref[...].astype(o_ref.dtype)


def pallas_matmul(x, w, *, tm=256, tn=256, tk=512):
    M, K = x.shape
    K2, N = w.shape
    assert K == K2
    tm = _pick_tile(M, tm)
    tn = _pick_tile(N, tn)
    tk = _pick_tile(K, tk)
    grid = (M // tm, N // tn, K // tk)
    return pl.pallas_call(
        _matmul_kernel,
        out_shape=jax.ShapeDtypeStruct((M, N), x.dtype),
        grid_spec=pltpu.PrefetchScalarGridSpec(
            num_scalar_prefetch=0,
            grid=grid,
            in_specs=[
                pl.BlockSpec((tm, tk), lambda i, j, k: (i, k)),
                pl.BlockSpec((tk, tn), lambda i, j, k: (k, j)),
            ],
            out_specs=pl.BlockSpec((tm, tn), lambda i, j, k: (i, j)),
            scratch_shapes=[pltpu.VMEM((tm, tn), jnp.float32)],
        ),
        compiler_params=pltpu.CompilerParams(
            dimension_semantics=("parallel", "parallel", "arbitrary"),
            vmem_limit_bytes=32 * 1024 * 1024,
        ),
    )(x, w)


# ----------------------------------------------------------------------------
# RoPE (neox) kernel, split-half formulation.  x: [H, S, D], cos/sin: [S, D/2].
# Applied once per head; attention scaling folded into q (scale kwarg).
# ----------------------------------------------------------------------------
def _rope_kernel(cos_ref, sin_ref, x_ref, o_ref, *, scale):
    cos = cos_ref[...]                        # [ts, half] f32
    sin = sin_ref[...]                        # [ts, half] f32
    half = cos.shape[-1]
    x = x_ref[0].astype(jnp.float32)          # [ts, D]   (elementwise math in f32)
    x1 = x[:, :half]
    x2 = x[:, half:]
    o1 = x1 * cos - x2 * sin
    o2 = x2 * cos + x1 * sin
    if scale != 1.0:                          # static (trace-time) branch
        o1 = o1 * scale
        o2 = o2 * scale
    o_ref[0, :, :half] = o1.astype(o_ref.dtype)
    o_ref[0, :, half:] = o2.astype(o_ref.dtype)


def pallas_rope(x, cos, sin, *, scale=1.0):
    H, S, D = x.shape
    half = D // 2
    ts = _pick_tile(S, 256)
    kernel = functools.partial(_rope_kernel, scale=float(scale))
    return pl.pallas_call(
        kernel,
        out_shape=jax.ShapeDtypeStruct((H, S, D), x.dtype),
        grid_spec=pltpu.PrefetchScalarGridSpec(
            num_scalar_prefetch=0,
            grid=(H, S // ts),
            in_specs=[
                pl.BlockSpec((ts, half), lambda h, si: (si, 0)),
                pl.BlockSpec((ts, half), lambda h, si: (si, 0)),
                pl.BlockSpec((1, ts, D), lambda h, si: (h, si, 0)),
            ],
            out_specs=pl.BlockSpec((1, ts, D), lambda h, si: (h, si, 0)),
        ),
        compiler_params=pltpu.CompilerParams(
            dimension_semantics=("parallel", "parallel"),
        ),
    )(cos, sin, x)


# ----------------------------------------------------------------------------
# Flash-style causal attention.  q: [Hq, S, D], k/v: [Hk, S, D]  ->  [Hq, S, D]
# q is already roped AND pre-scaled; k is roped.
# Grid: (head, q_tile, k_tile) with online softmax carried in VMEM scratch.
# ----------------------------------------------------------------------------
def _flash_attn_kernel(q_ref, k_ref, v_ref, o_ref, m_ref, l_ref, acc_ref, *, tq, tk):
    qi = pl.program_id(1)
    ki = pl.program_id(2)
    nk = pl.num_programs(2)

    @pl.when(ki == 0)
    def _():
        m_ref[...] = jnp.full(m_ref.shape, -jnp.inf, dtype=m_ref.dtype)
        l_ref[...] = jnp.zeros_like(l_ref)
        acc_ref[...] = jnp.zeros_like(acc_ref)

    # Causal pruning: only lower-triangular k tiles do any work.  The k/v index_map
    # clamps to min(ki, qi), so skipped steps re-see the same block (no extra DMA).
    @pl.when(ki <= qi)
    def _():
        q = q_ref[0]                       # [tq, D] bf16 (pre-scaled)
        k = k_ref[0]                       # [tk, D] bf16
        v = v_ref[0]                       # [tk, D] bf16

        s = jax.lax.dot_general(           # [tq, tk] f32 accumulation on the MXU
            q, k, (((1,), (1,)), ((), ())), preferred_element_type=jnp.float32
        )

        # Causal mask with global indices (only bites on the diagonal tile).
        row = qi * tq + jax.lax.broadcasted_iota(jnp.int32, (tq, tk), 0)
        col = ki * tk + jax.lax.broadcasted_iota(jnp.int32, (tq, tk), 1)
        s = jnp.where(col <= row, s, -1e30)

        m_prev = m_ref[...]                                    # [tq, 1]
        m_new = jnp.maximum(m_prev, jnp.max(s, axis=-1, keepdims=True))
        alpha = jnp.exp(m_prev - m_new)
        p = jnp.exp(s - m_new)                                 # f32

        l_ref[...] = alpha * l_ref[...] + jnp.sum(p, axis=-1, keepdims=True)
        acc_ref[...] = alpha * acc_ref[...] + jnp.dot(
            p.astype(v.dtype), v, preferred_element_type=jnp.float32
        )
        m_ref[...] = m_new

    @pl.when(ki == nk - 1)
    def _():
        inv_l = pl.reciprocal(l_ref[...], approx=True)
        o_ref[0] = (acc_ref[...] * inv_l).astype(o_ref.dtype)


def pallas_flash_attention(q, k, v):
    Hq, S, D = q.shape
    Hk = k.shape[0]
    assert Hq % Hk == 0
    group = Hq // Hk
    tq = tk = _pick_tile(S, 128)
    nq, nk = S // tq, S // tk

    kernel = functools.partial(_flash_attn_kernel, tq=tq, tk=tk)

    def kv_index_map(h, qi, ki):
        return (h // group, jnp.minimum(ki, qi), 0)

    return pl.pallas_call(
        kernel,
        out_shape=jax.ShapeDtypeStruct((Hq, S, D), q.dtype),
        grid_spec=pltpu.PrefetchScalarGridSpec(
            num_scalar_prefetch=0,
            grid=(Hq, nq, nk),
            in_specs=[
                pl.BlockSpec((1, tq, D), lambda h, qi, ki: (h, qi, 0)),  # q
                pl.BlockSpec((1, tk, D), kv_index_map),                  # k (GQA shared)
                pl.BlockSpec((1, tk, D), kv_index_map),                  # v (GQA shared)
            ],
            out_specs=pl.BlockSpec((1, tq, D), lambda h, qi, ki: (h, qi, 0)),
            scratch_shapes=[
                pltpu.VMEM((tq, 1), jnp.float32),   # running max m
                pltpu.VMEM((tq, 1), jnp.float32),   # running denom l
                pltpu.VMEM((tq, D), jnp.float32),   # output accumulator
            ],
        ),
        compiler_params=pltpu.CompilerParams(
            dimension_semantics=("parallel", "parallel", "arbitrary"),
            vmem_limit_bytes=32 * 1024 * 1024,
        ),
    )(q, k, v)


# ----------------------------------------------------------------------------
# GemmaAttention module (parameters held in JAX, forward runs Pallas kernels)
# ----------------------------------------------------------------------------
class GemmaAttentionPallas:
    def __init__(self, hidden_size, num_heads, num_kv_heads, head_dim,
                 max_position_embeddings=8192, rope_theta=10000.0,
                 dtype=jnp.bfloat16, key=None):
        self.hidden_size = hidden_size
        self.num_heads = num_heads                       # tp_size == 1
        self.num_kv_heads = num_kv_heads
        self.head_dim = head_dim
        self.q_size = num_heads * head_dim
        self.kv_size = num_kv_heads * head_dim
        self.scaling = head_dim ** (-0.5)
        self.rope_theta = rope_theta
        self.dtype = dtype

        if key is None:
            key = jax.random.PRNGKey(0)
        k1, k2 = jax.random.split(key)
        qkv_out = self.q_size + 2 * self.kv_size
        # nn.Linear weights are [out, in]; store transposed (and bf16) for x @ W^T.
        self.w_qkv_t = (0.02 * jax.random.normal(
            k1, (hidden_size, qkv_out), dtype=jnp.float32)).astype(dtype)
        self.w_o_t = (0.02 * jax.random.normal(
            k2, (self.q_size, hidden_size), dtype=jnp.float32)).astype(dtype)

    def _rope_cos_sin(self, positions):
        D = self.head_dim
        inv_freq = 1.0 / (self.rope_theta ** (
            jnp.arange(0, D, 2, dtype=jnp.float32) / D))               # [D/2]
        freqs = positions.astype(jnp.float32)[:, None] * inv_freq[None, :]  # [S, D/2]
        return jnp.cos(freqs), jnp.sin(freqs)                          # each [S, D/2]

    def forward(self, positions, hidden_states):
        S, H = hidden_states.shape
        assert H == self.hidden_size
        x = hidden_states.astype(self.dtype)                           # bf16 activations

        # qkv projection (tiled Pallas matmul, bf16 MXU operands / f32 accumulate)
        qkv = pallas_matmul(x, self.w_qkv_t)                           # [S, q+2kv]
        q = qkv[:, : self.q_size]
        k = qkv[:, self.q_size: self.q_size + self.kv_size]
        v = qkv[:, self.q_size + self.kv_size:]

        # [S, H*D] -> [H, S, D]
        # TODO(synk): with real Gemma head_dim (multiple of 128) the attention kernel can
        # consume/produce the [S, H*D] slabs directly via per-head column BlockSpecs and
        # skip these transposes; at toy head_dim=16 that violates the (8,128) block rule.
        q = q.reshape(S, self.num_heads, self.head_dim).transpose(1, 0, 2)
        k = k.reshape(S, self.num_kv_heads, self.head_dim).transpose(1, 0, 2)
        v = v.reshape(S, self.num_kv_heads, self.head_dim).transpose(1, 0, 2)

        # RoPE once per head (K is NOT re-roped per query head of the GQA group);
        # attention scaling folded into q here (O(S*D) instead of O(S^2)).
        cos, sin = self._rope_cos_sin(positions)
        q = pallas_rope(q, cos, sin, scale=self.scaling)
        k = pallas_rope(k, cos, sin, scale=1.0)

        # Flash-style causal attention (Pallas kernel)
        attn = pallas_flash_attention(q, k, v)                         # [Hq, S, D]

        # [Hq, S, D] -> [S, Hq*D]
        attn = attn.transpose(1, 0, 2).reshape(S, self.q_size)

        # output projection (tiled Pallas matmul)
        out = pallas_matmul(attn, self.w_o_t)                          # [S, hidden]
        return out.astype(hidden_states.dtype)


if __name__ == "__main__":
    hidden_size = 32
    num_heads = 4
    num_kv_heads = 2
    head_dim = 16
    seq = 8

    key = jax.random.PRNGKey(0)
    k_param, k_x = jax.random.split(key)

    module = GemmaAttentionPallas(
        hidden_size=hidden_size,
        num_heads=num_heads,
        num_kv_heads=num_kv_heads,
        head_dim=head_dim,
        key=k_param,
    )

    hidden_states = jax.random.normal(k_x, (seq, hidden_size), dtype=jnp.float32)
    positions = jnp.arange(seq, dtype=jnp.int32)

    out = module.forward(positions, hidden_states)
    out = jax.block_until_ready(out)
    assert out.shape == (seq, hidden_size)
    assert jnp.all(jnp.isfinite(out))
    print("KERNEL_OK")
</pallas_src>

<mosaic_0001>
module attributes {stable_mosaic.version = 11 : i64} {
  func.func @_matmul_kernel(%arg0: i32, %arg1: i32, %arg2: i32, %arg3: memref<8x32xbf16, #tpu.memory_space<vmem>>, %arg4: memref<32x128xbf16, #tpu.memory_space<vmem>>, %arg5: memref<8x128xbf16, #tpu.memory_space<vmem>>, %arg6: memref<8x128xf32, #tpu.memory_space<vmem>>) attributes {dimension_semantics = [#tpu.dimension_semantics<parallel>, #tpu.dimension_semantics<parallel>, #tpu.dimension_semantics<arbitrary>], iteration_bounds = array<i64: 1, 1, 1>, scalar_prefetch = 0 : i64, scratch_operands = 1 : i64, tpu.core_type = #tpu.core_type<tc>, window_params = [{transform_indices = @transform_0, window_bounds = array<i64: 8, 32>}, {transform_indices = @transform_1, window_bounds = array<i64: 32, 128>}, {transform_indices = @transform_2, window_bounds = array<i64: 8, 128>}]} {
    %c0_i32 = arith.constant 0 : i32
    %0 = arith.cmpi eq, %arg2, %c0_i32 : i32
    %1 = arith.extui %0 : i1 to i32
    %c0_i32_0 = arith.constant 0 : i32
    %2 = arith.cmpi ne, %1, %c0_i32_0 : i32
    scf.if %2 {
      %cst_10 = arith.constant 0.000000e+00 : f32
      %12 = vector.broadcast %cst_10 : f32 to vector<8x128xf32>
      %c0_11 = arith.constant 0 : index
      %c0_12 = arith.constant 0 : index
      %13 = vector.load %arg6[%c0_11, %c0_12] : memref<8x128xf32, #tpu.memory_space<vmem>>, vector<8x128xf32>
      tpu.vector_store %arg6[%c0_11, %c0_12], %12 {strides = array<i32>} : memref<8x128xf32, #tpu.memory_space<vmem>>, vector<8x128xf32>,
    } else {
    }
    %c0 = arith.constant 0 : index
    %c0_1 = arith.constant 0 : index
    %3 = vector.load %arg6[%c0, %c0_1] : memref<8x128xf32, #tpu.memory_space<vmem>>, vector<8x128xf32>
    %c0_2 = arith.constant 0 : index
    %c0_3 = arith.constant 0 : index
    %4 = vector.load %arg3[%c0_2, %c0_3] : memref<8x32xbf16, #tpu.memory_space<vmem>>, vector<8x32xbf16>
    %c0_4 = arith.constant 0 : index
    %c0_5 = arith.constant 0 : index
    %5 = vector.load %arg4[%c0_4, %c0_5] : memref<32x128xbf16, #tpu.memory_space<vmem>>, vector<32x128xbf16>
    %cst = arith.constant dense<0.000000e+00> : vector<8x128xf32>
    %6 = tpu.matmul %4, %5, %cst {dimension_numbers = #tpu.dot_dimension_numbers<[1], [0], [0], [1], [0, 0, 1, 1], [], []>} : vector<8x32xbf16>, vector<32x128xbf16>, vector<8x128xf32> -> vector<8x128xf32>
    %7 = arith.addf %3, %6 : vector<8x128xf32>
    %c0_6 = arith.constant 0 : index
    %c0_7 = arith.constant 0 : index
    %8 = vector.load %arg6[%c0_6, %c0_7] : memref<8x128xf32, #tpu.memory_space<vmem>>, vector<8x128xf32>
    tpu.vector_store %arg6[%c0_6, %c0_7], %7 {strides = array<i32>} : memref<8x128xf32, #tpu.memory_space<vmem>>, vector<8x128xf32>,
    %c0_i32_8 = arith.constant 0 : i32
    %9 = arith.cmpi eq, %arg2, %c0_i32_8 : i32
    %10 = arith.extui %9 : i1 to i32
    %c0_i32_9 = arith.constant 0 : i32
    %11 = arith.cmpi ne, %10, %c0_i32_9 : i32
    scf.if %11 {
      %c0_10 = arith.constant 0 : index
      %c0_11 = arith.constant 0 : index
      %12 = vector.load %arg6[%c0_10, %c0_11] : memref<8x128xf32, #tpu.memory_space<vmem>>, vector<8x128xf32>
      %13 = arith.truncf %12 : vector<8x128xf32> to vector<8x128xbf16>
      %c0_12 = arith.constant 0 : index
      %c0_13 = arith.constant 0 : index
      %14 = vector.load %arg5[%c0_12, %c0_13] : memref<8x128xbf16, #tpu.memory_space<vmem>>, vector<8x128xbf16>
      tpu.vector_store %arg5[%c0_12, %c0_13], %13 {strides = array<i32>} : memref<8x128xbf16, #tpu.memory_space<vmem>>, vector<8x128xbf16>,
    } else {
    }
    return
  }
  func.func @transform_0(%arg0: i32, %arg1: i32, %arg2: i32) -> (i32, i32) {
    %c0_i32 = arith.constant 0 : i32
    return %arg0, %arg2 : i32, i32
  }
  func.func @transform_1(%arg0: i32, %arg1: i32, %arg2: i32) -> (i32, i32) {
    %c0_i32 = arith.constant 0 : i32
    return %arg2, %arg1 : i32, i32
  }
  func.func @transform_2(%arg0: i32, %arg1: i32, %arg2: i32) -> (i32, i32) {
    %c0_i32 = arith.constant 0 : i32
    return %arg0, %arg1 : i32, i32
  }
}

</mosaic_0001>

<llo_original>
// kernel: tpu_custom_call.1
$region0: #{tpu_custom_call.1}
  #allocation0 [shape = 'u32[]', space=smem, size = 0x4, offset = 0x4, fixed_abs, tag = 'smem constant byte address 0x4 - core index']
  #allocation1 [shape = 'u32[72,128]{1,0:T(1,128)}', space=vmem, size = 0x9000, scoped, tag = 'internal scratch']
  #allocation2 [shape = 'f32[8,128]{1,0:T(8,128)}', space=vmem, size = 0x1000, scoped, tag = 'scratch operand']
  %s0 = inlined_call_operand.hbm [shape: bf16[8,32], index: 0, kind: input, shape index: {}]
  %s1 = inlined_call_operand.hbm [shape: bf16[32,128], index: 1, kind: input, shape index: {}]
  %s2 = inlined_call_operand.hbm [shape: bf16[8,128], index: 2, kind: output, shape index: {}]
  %s3 = sld [smem:[#allocation0]]
  $region34: #{tpu_custom_call.1} parent=0
    _
  %s5 = ssub.s32 1, %s3
  %s6 = scalar_select 0, %s5, %s3
  $region1: #{tpu_custom_call.1} parent=0
    #allocation3 [shape = 'u8[2048]{0}', space=vmem, size = 0x800, scoped, tag = 'input window, operand 0, single buffered']
    #allocation4 [shape = 's32[1]{0}', space=sflag, size = 0x4, scoped, tag = 'scoped memory for tpu_custom_call.1']
    #allocation5 [shape = 's32[1]{0}', space=sflag, size = 0x4, scoped, tag = 'scoped memory for tpu_custom_call.1']
    #allocation6 [shape = 'u8[8192]{0}', space=vmem, size = 0x2000, scoped, tag = 'input window, operand 1, single buffered']
    #allocation7 [shape = 's32[1]{0}', space=sflag, size = 0x4, scoped, tag = 'scoped memory for tpu_custom_call.1']
    #allocation8 [shape = 'u8[2048]{0}', space=vmem, size = 0x800, scoped, tag = 'output window, operand 0, single buffered']
    %7 = vsyncpa [#allocation4], 0
    %8 = vsyncpa [#allocation7], 0
    %9 = vsyncpa [#allocation5], 0
    // Predicated region
    $region2: #{tpu_custom_call.1} parent=1 // pred_check
      _
    $region3: #{tpu_custom_call.1} parent=1 // pred_check_branch
      %11 = sbr.rel (0) target = $region5
    $region4: #{tpu_custom_call.1} parent=1 // pred_region
      %13 = vsyncadd [#allocation4], 0
      %s15 = sshll.u32 %s0, 4
      %s16 = int_to_ptr.hbm [resolvable:$true] %s15
      %s17 = sshll.u32 [#allocation3], 4
      %s18 = int_to_ptr.vmem [resolvable:$true] %s17
      %20 = dma.hbm_to_vmem [thread:$0]  %s16, 64, %s18, [#allocation4]
    $region5: #{tpu_custom_call.1} parent=1 // pred_fallthru
      _
    // Predicated region
    $region6: #{tpu_custom_call.1} parent=1 // pred_check
      _
    $region7: #{tpu_custom_call.1} parent=1 // pred_check_branch
      %22 = sbr.rel (0) target = $region9
    $region8: #{tpu_custom_call.1} parent=1 // pred_region
      %24 = vsyncadd [#allocation7], 0
      %s25 = sshll.u32 %s1, 4
      %s26 = int_to_ptr.hbm [resolvable:$true] %s25
      %s27 = sshll.u32 [#allocation6], 4
      %s28 = int_to_ptr.vmem [resolvable:$true] %s27
      %33 = dma.hbm_to_vmem [thread:$0]  %s26, 256, %s28, [#allocation7], 64, 64, 4
    $region9: #{tpu_custom_call.1} parent=1 // pred_fallthru
      _
    // Predicated region
    $region10: #{tpu_custom_call.1} parent=1 // pred_check
      _
    $region11: #{tpu_custom_call.1} parent=1 // pred_check_branch
      %35 = sbr.rel (0) target = $region13
    $region12: #{tpu_custom_call.1} parent=1 // pred_region
      %37 = dma.done [#allocation4], 64
    $region13: #{tpu_custom_call.1} parent=1 // pred_fallthru
      _
    // Predicated region
    $region14: #{tpu_custom_call.1} parent=1 // pred_check
      _
    $region15: #{tpu_custom_call.1} parent=1 // pred_check_branch
      %39 = sbr.rel (0) target = $region17
    $region16: #{tpu_custom_call.1} parent=1 // pred_region
      %41 = dma.done [#allocation7], 256
    $region17: #{tpu_custom_call.1} parent=1 // pred_fallthru
      _
    %p43 = scmp.eq.s32.totalorder 0, 0
    // Predicated region
    $region18: #{tpu_custom_call.1} parent=1 // pred_check
      %p44 = pneg %p43
    $region19: #{tpu_custom_call.1} parent=1 // pred_check_branch
      %46 = sbr.rel (%p44) target = $region21
    $region20: #{tpu_custom_call.1} parent=1 // pred_region
      %47 = vst [vmem:[#allocation2] sm:$0xff] 0.0
    $region21: #{tpu_custom_call.1} parent=1 // pred_fallthru
      _
    %v48 = vld [vmem:[#allocation2] sm:$0xff]
    %v49 = vld [vmem:[#allocation3] sm:$0xf]
    %v50 = vld [vmem:[#allocation6] sm:$0xf]
    %v51 = vld [vmem:[#allocation6 + $0x4] sm:$0xf]
    %v52 = vld [vmem:[#allocation6 + $0x8] sm:$0xf]
    %v53 = vld [vmem:[#allocation6 + $0xc] sm:$0xf]
    %v58 = vunpack.c.l.b16 %v50
    %v59 = vunpack.c.l.b16 %v51
    %v60 = vunpack.c.l.b16 %v52
    %v61 = vunpack.c.l.b16 %v53
    %v62 = vpack.c.b16 %v59, %v58
    %v63 = vpack.c.b16 %v61, %v60
    %vm66 = vcmask 261120
    %v68 = vsel %vm66, %v49, 0
    %70 = vmatpush.bf16.msra.mxu0 0
    %71 = vmatpush.bf16.msra.mxu0 0
    %72 = vmatpush.bf16.msra.mxu0 0
    %73 = vmatpush.bf16.msra.mxu0 0
    %74 = vmatpush.bf16.msra.mxu0 0
    %75 = vmatpush.bf16.msra.mxu0 0
    %76 = vmatpush.bf16.msra.mxu0 %v63
    %77 = vmatpush.bf16.msra.mxu0 %v62
    %78 = vmatmul.bf16.gmra.mxu0 %v68
    %v79 = vpop.f32.mrf.mxu0
    %v80 = vadd.f32 0.0, %v79
    %v81 = vpop.f32.mrf.mxu0
    %82 = vdwg.mxu0
    %v83 = vadd.f32 %v48, %v80
    %84 = vst [vmem:[#allocation2] sm:$0xff] %v83
    // Predicated region
    $region22: #{tpu_custom_call.1} parent=1 // pred_check
      %p85 = pneg %p43
    $region23: #{tpu_custom_call.1} parent=1 // pred_check_branch
      %87 = sbr.rel (%p85) target = $region25
    $region24: #{tpu_custom_call.1} parent=1 // pred_region
      %v88 = vld [vmem:[#allocation2] sm:$0xff]
      %v89 = vpack.c.bf16 %v88, %v88
      %90 = vst [vmem:[#allocation8] sm:$0xf] %v89
    $region25: #{tpu_custom_call.1} parent=1 // pred_fallthru
      _
    // Predicated region
    $region26: #{tpu_custom_call.1} parent=1 // pred_check
      _
    $region27: #{tpu_custom_call.1} parent=1 // pred_check_branch
      %92 = sbr.rel (0) target = $region29
    $region28: #{tpu_custom_call.1} parent=1 // pred_region
      %94 = vsyncadd [#allocation5], 0
      %s96 = sshll.u32 [#allocation8], 4
      %s97 = int_to_ptr.vmem [resolvable:$true] %s96
      %s98 = sshll.u32 %s2, 4
      %s99 = int_to_ptr.hbm [resolvable:$true] %s98
      %101 = dma.vmem_to_hbm [thread:$0]  %s97, 64, %s99, [#allocation5]
    $region29: #{tpu_custom_call.1} parent=1 // pred_fallthru
      _
    // Predicated region
    $region30: #{tpu_custom_call.1} parent=1 // pred_check
      _
    $region31: #{tpu_custom_call.1} parent=1 // pred_check_branch
      %103 = sbr.rel (0) target = $region33
    $region32: #{tpu_custom_call.1} parent=1 // pred_region
      %105 = dma.done [#allocation5], 64
    $region33: #{tpu_custom_call.1} parent=1 // pred_fallthru
      _
    %106 = vsyncpa [#allocation4], 1
    %107 = vsyncpa [#allocation7], 1
    %108 = vsyncpa [#allocation5], 1

</llo_original>
